<compile_context>
chip_gen: v6e
topology: v6e:2x2x1
jax: 0.10.0
libtpu: 0.0.40
codegen_flags: <defaults>
</compile_context>

<pallas_src>
import functools

import jax
import jax.numpy as jnp
from jax import lax
from jax.experimental import pallas as pl
from jax.experimental.pallas import tpu as pltpu

IN_F = 3    # fc1 in_features
HID_F = 20  # fc1 out_features / fc2 in_features
OUT_F = 3   # fc2 out_features

# ~9 MiB VMEM at this tile (in/out blocks double-buffered + f32 h1 intermediate):
# fits v5e's 16 MiB default scoped VMEM and keeps the grid >= 2 on v7x for N > 32K.
MAX_LANE_TILE = 32768
# Below this many rows, a standalone pallas_call is pure launch/layout overhead.
SMALL_N_FALLBACK = 4096


def _round_up(a: int, b: int) -> int:
    return ((a + b - 1) // b) * b


def mlp_detach_kernel(xt_ref, wb1_ref, wb2_ref, o_ref):
    # xt_ref : (IN_F, TN)         -- batch on the lane axis (lane-dense)
    # wb1_ref: (HID_F, IN_F + 1)  -- [w1 | b1] packed slab (VMEM-resident)
    # wb2_ref: (OUT_F, HID_F + 1) -- [w2 | b2] packed slab (VMEM-resident)
    # o_ref  : (OUT_F, TN)
    xt = xt_ref[...]                                                # (3, TN)
    w1 = wb1_ref[:, :IN_F]                                          # (20, 3)
    b1 = wb1_ref[:, IN_F:IN_F + 1]                                  # (20, 1) lane-broadcast
    h1 = jnp.tanh(
        jnp.dot(w1, xt, preferred_element_type=jnp.float32) + b1    # (20, TN)
    )
    # h1 = h1.detach()  -> forward no-op (gradient stop only)
    w2 = wb2_ref[:, :HID_F]                                         # (3, 20)
    b2 = wb2_ref[:, HID_F:HID_F + 1]                                # (3, 1) lane-broadcast
    y = jnp.dot(w2, h1, preferred_element_type=jnp.float32) + b2    # (3, TN)
    o_ref[...] = y.astype(o_ref.dtype)


def my_net_with_detach_feature_major(xt, w1, b1, w2, b2, *, lane_tile=None):
    """Feature-major forward pass (no layout shuffles).

    xt: (3, N) float32 -- activations kept feature-major by the caller.
    Returns (3, N) float32.
    """
    xt = xt.astype(jnp.float32)
    n = xt.shape[1]
    n_pad = _round_up(n, 128)
    if n_pad != n:
        # Pad only to the 128-lane granule (not to lane_tile); any remaining ragged
        # edge is handled by a partial final grid block (masked stores).
        xt = jnp.pad(xt, ((0, 0), (0, n_pad - n)))

    if lane_tile is None:
        # Target >= 2 grid steps (v7x megacore) but never exceed MAX_LANE_TILE (VMEM).
        lane_tile = min(MAX_LANE_TILE, max(128, _round_up(pl.cdiv(n_pad, 2), 128)))
    else:
        if lane_tile % 128 != 0:
            raise ValueError("lane_tile must be a multiple of 128")
    lane_tile = min(lane_tile, n_pad)
    num_blocks = pl.cdiv(n_pad, lane_tile)

    # Fold biases into the weight slabs: wb1 = [w1 | b1], wb2 = [w2 | b2].
    # Constant-folds under jit when params are static; removes two padded bias DMAs.
    wb1 = jnp.concatenate([w1, b1[:, None]], axis=1).astype(jnp.float32)  # (20, 4)
    wb2 = jnp.concatenate([w2, b2[:, None]], axis=1).astype(jnp.float32)  # (3, 21)

    y_fm = pl.pallas_call(
        mlp_detach_kernel,
        out_shape=jax.ShapeDtypeStruct((OUT_F, n_pad), jnp.float32),
        grid_spec=pltpu.PrefetchScalarGridSpec(
            num_scalar_prefetch=0,
            grid=(num_blocks,),
            in_specs=[
                pl.BlockSpec((IN_F, lane_tile), lambda i: (0, i)),
                pl.BlockSpec((HID_F, IN_F + 1), lambda i: (0, 0)),    # resident slab
                pl.BlockSpec((OUT_F, HID_F + 1), lambda i: (0, 0)),   # resident slab
            ],
            out_specs=pl.BlockSpec((OUT_F, lane_tile), lambda i: (0, i)),
        ),
        compiler_params=pltpu.CompilerParams(
            dimension_semantics=("parallel",),   # v7x: shard batch over 2 TCs
        ),
    )(xt, wb1, wb2)

    return y_fm[:, :n]


def my_net_with_detach(x, w1, b1, w2, b2, *, lane_tile=None,
                       min_pallas_rows=SMALL_N_FALLBACK):
    """Forward pass of MyNetWithDetach, PyTorch layouts.

    x:  (N, 3)  float32
    w1: (20, 3) float32  (PyTorch Linear layout: (out, in))
    b1: (20,)   float32
    w2: (3, 20) float32
    b2: (3,)    float32
    returns (N, 3) float32
    """
    n = x.shape[0]
    if n < min_pallas_rows:
        # Small-N fallback: let XLA fuse the tiny MLP; no pallas launch, no transposes.
        h1 = lax.stop_gradient(jnp.tanh(x @ w1.T + b1))   # detach()
        return h1 @ w2.T + b2

    # One fused transpose(+pad) per side to/from the feature-major kernel layout.
    y_fm = my_net_with_detach_feature_major(x.T, w1, b1, w2, b2, lane_tile=lane_tile)
    return y_fm.T   # (N, 3) to match the PyTorch module


def _reference(x, w1, b1, w2, b2):
    h1 = jnp.tanh(x @ w1.T + b1)
    return h1 @ w2.T + b2


if __name__ == "__main__":
    key = jax.random.PRNGKey(0)
    kx, k1, k2, k3, k4, kx_big = jax.random.split(key, 6)

    # Shapes consistent with the module: fc1 = Linear(3, 20), fc2 = Linear(20, 3),
    # batch of 10 as in the spec's x = torch.zeros(10, 3).
    x = jax.random.normal(kx, (10, IN_F), dtype=jnp.float32)
    w1 = jax.random.normal(k1, (HID_F, IN_F), dtype=jnp.float32) * 0.5
    b1 = jax.random.normal(k2, (HID_F,), dtype=jnp.float32) * 0.1
    w2 = jax.random.normal(k3, (OUT_F, HID_F), dtype=jnp.float32) * 0.5
    b2 = jax.random.normal(k4, (OUT_F,), dtype=jnp.float32) * 0.1

    ref_small = _reference(x, w1, b1, w2, b2)

    # 1) Spec-sized batch (10, 3), forced through the Pallas kernel path.
    fwd_force = jax.jit(functools.partial(my_net_with_detach, min_pallas_rows=0))
    out_small = jax.block_until_ready(fwd_force(x, w1, b1, w2, b2))
    assert out_small.shape == (10, OUT_F), out_small.shape
    assert jnp.allclose(out_small, ref_small, atol=1e-5, rtol=1e-5), "pallas path mismatch"

    # 2) Spec-sized batch through the default path (small-N fallback, no pallas_call).
    out_fb = jax.block_until_ready(jax.jit(my_net_with_detach)(x, w1, b1, w2, b2))
    assert jnp.allclose(out_fb, ref_small, atol=1e-5, rtol=1e-5), "fallback mismatch"

    # 3) A batch large enough to exercise the tiled pipeline: grid >= 2 blocks
    #    (megacore-shardable) with a partial last block (6000 -> pad 6016, tile 3072).
    x_big = jax.random.normal(kx_big, (6000, IN_F), dtype=jnp.float32)
    out_big = jax.block_until_ready(jax.jit(my_net_with_detach)(x_big, w1, b1, w2, b2))
    ref_big = _reference(x_big, w1, b1, w2, b2)
    assert out_big.shape == (6000, OUT_F), out_big.shape
    assert jnp.allclose(out_big, ref_big, atol=1e-4, rtol=1e-4), "tiled path mismatch"

    print("KERNEL_OK")
</pallas_src>

<mosaic_0001>
module attributes {stable_mosaic.version = 11 : i64} {
  func.func @mlp_detach_kernel(%arg0: i32, %arg1: memref<3x128xf32, #tpu.memory_space<vmem>>, %arg2: memref<20x4xf32, #tpu.memory_space<vmem>>, %arg3: memref<3x21xf32, #tpu.memory_space<vmem>>, %arg4: memref<3x128xf32, #tpu.memory_space<vmem>>) attributes {dimension_semantics = [#tpu.dimension_semantics<parallel>], iteration_bounds = array<i64: 1>, scalar_prefetch = 0 : i64, scratch_operands = 0 : i64, tpu.core_type = #tpu.core_type<tc>, window_params = [{transform_indices = @transform_0, window_bounds = array<i64: 3, 128>}, {pipeline_mode = #tpu.pipeline_mode<synchronous>, transform_indices = @transform_1, window_bounds = array<i64: 20, 4>}, {pipeline_mode = #tpu.pipeline_mode<synchronous>, transform_indices = @transform_2, window_bounds = array<i64: 3, 21>}, {transform_indices = @transform_3, window_bounds = array<i64: 3, 128>}]} {
    %c0 = arith.constant 0 : index
    %c0_0 = arith.constant 0 : index
    %0 = vector.load %arg1[%c0, %c0_0] : memref<3x128xf32, #tpu.memory_space<vmem>>, vector<3x128xf32>
    %c0_1 = arith.constant 0 : index
    %c0_2 = arith.constant 0 : index
    %1 = vector.load %arg2[%c0_1, %c0_2] : memref<20x4xf32, #tpu.memory_space<vmem>>, vector<20x3xf32>
    %c0_3 = arith.constant 0 : index
    %c3 = arith.constant 3 : index
    %2 = vector.load %arg2[%c0_3, %c3] : memref<20x4xf32, #tpu.memory_space<vmem>>, vector<20x1xf32>
    %cst = arith.constant dense<0.000000e+00> : vector<20x128xf32>
    %3 = tpu.matmul %1, %0, %cst {dimension_numbers = #tpu.dot_dimension_numbers<[1], [0], [0], [1], [0, 0, 1, 1], [], []>} : vector<20x3xf32>, vector<3x128xf32>, vector<20x128xf32> -> vector<20x128xf32>
    %4 = vector.broadcast %2 : vector<20x1xf32> to vector<20x128xf32>
    %5 = arith.addf %3, %4 : vector<20x128xf32>
    %6 = math.tanh %5 : vector<20x128xf32>
    %c0_4 = arith.constant 0 : index
    %c0_5 = arith.constant 0 : index
    %7 = vector.load %arg3[%c0_4, %c0_5] : memref<3x21xf32, #tpu.memory_space<vmem>>, vector<3x20xf32>
    %c0_6 = arith.constant 0 : index
    %c20 = arith.constant 20 : index
    %8 = vector.load %arg3[%c0_6, %c20] : memref<3x21xf32, #tpu.memory_space<vmem>>, vector<3x1xf32>
    %cst_7 = arith.constant dense<0.000000e+00> : vector<3x128xf32>
    %9 = tpu.matmul %7, %6, %cst_7 {dimension_numbers = #tpu.dot_dimension_numbers<[1], [0], [0], [1], [0, 0, 1, 1], [], []>} : vector<3x20xf32>, vector<20x128xf32>, vector<3x128xf32> -> vector<3x128xf32>
    %10 = vector.broadcast %8 : vector<3x1xf32> to vector<3x128xf32>
    %11 = arith.addf %9, %10 : vector<3x128xf32>
    %c0_8 = arith.constant 0 : index
    %c0_9 = arith.constant 0 : index
    %12 = vector.load %arg4[%c0_8, %c0_9] : memref<3x128xf32, #tpu.memory_space<vmem>>, vector<3x128xf32>
    tpu.vector_store %arg4[%c0_8, %c0_9], %11 {strides = array<i32>} : memref<3x128xf32, #tpu.memory_space<vmem>>, vector<3x128xf32>,
    return
  }
  func.func @transform_0(%arg0: i32) -> (i32, i32) {
    %c0_i32 = arith.constant 0 : i32
    %c0_i32_0 = arith.constant 0 : i32
    return %c0_i32, %arg0 : i32, i32
  }
  func.func @transform_1(%arg0: i32) -> (i32, i32) {
    %c0_i32 = arith.constant 0 : i32
    %c0_i32_0 = arith.constant 0 : i32
    %c0_i32_1 = arith.constant 0 : i32
    return %c0_i32, %c0_i32_0 : i32, i32
  }
  func.func @transform_2(%arg0: i32) -> (i32, i32) {
    %c0_i32 = arith.constant 0 : i32
    %c0_i32_0 = arith.constant 0 : i32
    %c0_i32_1 = arith.constant 0 : i32
    return %c0_i32, %c0_i32_0 : i32, i32
  }
  func.func @transform_3(%arg0: i32) -> (i32, i32) {
    %c0_i32 = arith.constant 0 : i32
    %c0_i32_0 = arith.constant 0 : i32
    return %c0_i32, %arg0 : i32, i32
  }
}

</mosaic_0001>

<llo_original>
// kernel: my_net_with_detach.1
$region0: #{my_net_with_detach.1}
  #allocation0 [shape = 'u32[]', space=smem, size = 0x4, offset = 0x4, fixed_abs, tag = 'smem constant byte address 0x4 - core index']
  #allocation1 [shape = 'u32[144,128]{1,0:T(1,128)}', space=vmem, size = 0x12000, scoped, tag = 'internal scratch']
  %s0 = inlined_call_operand.vmem [shape: f32[3,128], index: 0, kind: input, shape index: {}]
  %s1 = inlined_call_operand.vmem [shape: f32[20,4], index: 1, kind: input, shape index: {}]
  %s2 = inlined_call_operand.vmem [shape: f32[3,21], index: 2, kind: input, shape index: {}]
  %s3 = inlined_call_operand.vmem [shape: f32[3,128], index: 3, kind: output, shape index: {}]
  %s4 = sld [smem:[#allocation0]]
  $region22: #{my_net_with_detach.1} parent=0
    _
  %s6 = ssub.s32 1, %s4
  %s7 = scalar_select 0, %s6, %s4
  // Predicated region
  $region2: #{my_net_with_detach.1} parent=0 // pred_check
    _
  $region3: #{my_net_with_detach.1} parent=0 // pred_check_branch
    %9 = sbr.rel (0) target = $region5
  $region4: #{my_net_with_detach.1} parent=0 // pred_region
    _
  $region5: #{my_net_with_detach.1} parent=0 // pred_fallthru
    _
  // Predicated region
  $region6: #{my_net_with_detach.1} parent=0 // pred_check
    _
  $region7: #{my_net_with_detach.1} parent=0 // pred_check_branch
    %11 = sbr.rel (0) target = $region9
  $region8: #{my_net_with_detach.1} parent=0 // pred_region
    _
  $region9: #{my_net_with_detach.1} parent=0 // pred_fallthru
    _
  // Predicated region
  $region10: #{my_net_with_detach.1} parent=0 // pred_check
    _
  $region11: #{my_net_with_detach.1} parent=0 // pred_check_branch
    %13 = sbr.rel (0) target = $region13
  $region12: #{my_net_with_detach.1} parent=0 // pred_region
    _
  $region13: #{my_net_with_detach.1} parent=0 // pred_fallthru
    _
  %v14 = vld [vmem:[%s0] sm:$0x7]
  %v15 = vld [vmem:[%s1] sm:$0xff]
  %v16 = vld [vmem:[%s1 + $0x8] sm:$0xff]
  %v17 = vld [vmem:[%s1 + $0x10] sm:$0xf]
  %19 = vset.pattern.permute.xlu0 3
  %20 = vperm.xlu0 %19, %v15
  %v21 = vpop.permute.xlu0 %20
  %24 = vset.pattern.permute.xlu0 3
  %25 = vperm.xlu0 %24, %v16
  %v26 = vpop.permute.xlu0 %25
  %29 = vset.pattern.permute.xlu0 3
  %30 = vperm.xlu0 %29, %v17
  %v31 = vpop.permute.xlu0 %30
  %vm33 = vcmask 23552
  %v34 = vsel %vm33, %v15, 0
  %v36 = vsel %vm33, %v16, 0
  %v38 = vsel %vm33, %v17, 0
  %vm40 = vcmask 1042432
  %v42 = vsel %vm40, %v14, 0
  %44 = vmatprep.subr.mxu0 0.0
  %45 = vmatpush1.msra.mxu0 0.0
  %46 = vmatprep.subr.mxu0 0.0
  %47 = vmatpush1.msra.mxu0 0.0
  %48 = vmatprep.subr.mxu0 0.0
  %49 = vmatpush1.msra.mxu0 0.0
  %50 = vmatprep.subr.mxu0 0.0
  %51 = vmatpush1.msra.mxu0 0.0
  %52 = vmatprep.subr.mxu0 0.0
  %53 = vmatpush1.msra.mxu0 0.0
  %54 = vmatprep.subr.mxu0 0.0
  %55 = vmatpush1.msra.mxu0 0.0
  %56 = vmatprep.subr.mxu0 0.0
  %57 = vmatpush1.msra.mxu0 0.0
  %58 = vmatprep.subr.mxu0 0.0
  %59 = vmatpush1.msra.mxu0 0.0
  %60 = vmatprep.subr.mxu0 0.0
  %61 = vmatpush1.msra.mxu0 0.0
  %62 = vmatprep.subr.mxu0 0.0
  %63 = vmatpush1.msra.mxu0 0.0
  %64 = vmatprep.subr.mxu0 0.0
  %65 = vmatpush1.msra.mxu0 0.0
  %66 = vmatprep.subr.mxu0 0.0
  %67 = vmatpush1.msra.mxu0 0.0
  %68 = vmatprep.subr.mxu0 0.0
  %69 = vmatpush1.msra.mxu0 0.0
  %70 = vmatprep.subr.mxu0 0.0
  %71 = vmatpush1.msra.mxu0 0.0
  %72 = vmatprep.subr.mxu0 0.0
  %73 = vmatpush1.msra.mxu0 0.0
  %74 = vmatprep.subr.mxu0 0.0
  %75 = vmatpush1.msra.mxu0 %v42
  %76 = vmatprep.subr.mxu0 0.0
  %77 = vmatpush2.msra.mxu0 0.0
  %78 = vmatprep.subr.mxu0 0.0
  %79 = vmatpush2.msra.mxu0 0.0
  %80 = vmatprep.subr.mxu0 0.0
  %81 = vmatpush2.msra.mxu0 0.0
  %82 = vmatprep.subr.mxu0 0.0
  %83 = vmatpush2.msra.mxu0 0.0
  %84 = vmatprep.subr.mxu0 0.0
  %85 = vmatpush2.msra.mxu0 0.0
  %86 = vmatprep.subr.mxu0 0.0
  %87 = vmatpush2.msra.mxu0 0.0
  %88 = vmatprep.subr.mxu0 0.0
  %89 = vmatpush2.msra.mxu0 0.0
  %90 = vmatprep.subr.mxu0 0.0
  %91 = vmatpush2.msra.mxu0 0.0
  %92 = vmatprep.subr.mxu0 0.0
  %93 = vmatpush2.msra.mxu0 0.0
  %94 = vmatprep.subr.mxu0 0.0
  %95 = vmatpush2.msra.mxu0 0.0
  %96 = vmatprep.subr.mxu0 0.0
  %97 = vmatpush2.msra.mxu0 0.0
  %98 = vmatprep.subr.mxu0 0.0
  %99 = vmatpush2.msra.mxu0 0.0
  %100 = vmatprep.subr.mxu0 0.0
  %101 = vmatpush2.msra.mxu0 0.0
  %102 = vmatprep.subr.mxu0 0.0
  %103 = vmatpush2.msra.mxu0 0.0
  %104 = vmatprep.subr.mxu0 0.0
  %105 = vmatpush2.msra.mxu0 0.0
  %106 = vmatprep.subr.mxu0 0.0
  %107 = vmatpush2.msra.mxu0 0.0
  %108 = vmatprep.mubr.f32.mxu0 0.0
  %109 = vmatmul.mubr.f32.gmra.mxu0 %v34
  %v110 = vpop.f32.mrf.mxu0
  %v111 = vadd.f32 %v21, %v110
  %v112 = vpop.f32.mrf.mxu0
  %113 = vmatprep.mubr.f32.mxu0 0.0
  %114 = vmatmul.mubr.f32.gmra.mxu0 %v36
  %v115 = vpop.f32.mrf.mxu0
  %v116 = vadd.f32 %v26, %v115
  %v117 = vpop.f32.mrf.mxu0
  %118 = vmatprep.mubr.f32.mxu0 0.0
  %119 = vmatmul.mubr.f32.gmra.mxu0 %v38
  %v120 = vpop.f32.mrf.mxu0
  %v121 = vadd.f32 %v31, %v120
  %v122 = vpop.f32.mrf.mxu0
  %123 = vdwg.mxu0
  %v124 = vtanh.pop %v111
  %v125 = vtanh.pop %v116
  %v126 = vtanh.pop %v121
  %v127 = vld [vmem:[%s2] sm:$0x7]
  %129 = vset.pattern.permute.xlu0 20
  %130 = vperm.xlu0 %129, %v127
  %v131 = vpop.permute.xlu0 %130
  %vm133 = vcmask 162816
  %v134 = vsel %vm133, %v127, 0
  %vm136 = vcmask 1043456
  %v138 = vsel %vm136, %v126, 0
  %140 = vmatprep.subr.mxu0 0.0
  %141 = vmatpush1.msra.mxu0 0.0
  %142 = vmatprep.subr.mxu0 0.0
  %143 = vmatpush1.msra.mxu0 0.0
  %144 = vmatprep.subr.mxu0 0.0
  %145 = vmatpush1.msra.mxu0 0.0
  %146 = vmatprep.subr.mxu0 0.0
  %147 = vmatpush1.msra.mxu0 0.0
  %148 = vmatprep.subr.mxu0 0.0
  %149 = vmatpush1.msra.mxu0 0.0
  %150 = vmatprep.subr.mxu0 0.0
  %151 = vmatpush1.msra.mxu0 0.0
  %152 = vmatprep.subr.mxu0 0.0
  %153 = vmatpush1.msra.mxu0 0.0
  %154 = vmatprep.subr.mxu0 0.0
  %155 = vmatpush1.msra.mxu0 0.0
  %156 = vmatprep.subr.mxu0 0.0
  %157 = vmatpush1.msra.mxu0 0.0
  %158 = vmatprep.subr.mxu0 0.0
  %159 = vmatpush1.msra.mxu0 0.0
  %160 = vmatprep.subr.mxu0 0.0
  %161 = vmatpush1.msra.mxu0 0.0
  %162 = vmatprep.subr.mxu0 0.0
  %163 = vmatpush1.msra.mxu0 0.0
  %164 = vmatprep.subr.mxu0 0.0
  %165 = vmatpush1.msra.mxu0 0.0
  %166 = vmatprep.subr.mxu0 0.0
  %167 = vmatpush1.msra.mxu0 %v138
  %168 = vmatprep.subr.mxu0 0.0
  %169 = vmatpush1.msra.mxu0 %v125
  %170 = vmatprep.subr.mxu0 0.0
  %171 = vmatpush1.msra.mxu0 %v124
  %172 = vmatprep.subr.mxu0 0.0
  %173 = vmatpush2.msra.mxu0 0.0
  %174 = vmatprep.subr.mxu0 0.0
  %175 = vmatpush2.msra.mxu0 0.0
  %176 = vmatprep.subr.mxu0 0.0
  %177 = vmatpush2.msra.mxu0 0.0
  %178 = vmatprep.subr.mxu0 0.0
  %179 = vmatpush2.msra.mxu0 0.0
  %180 = vmatprep.subr.mxu0 0.0
  %181 = vmatpush2.msra.mxu0 0.0
  %182 = vmatprep.subr.mxu0 0.0
  %183 = vmatpush2.msra.mxu0 0.0
  %184 = vmatprep.subr.mxu0 0.0
  %185 = vmatpush2.msra.mxu0 0.0
  %186 = vmatprep.subr.mxu0 0.0
  %187 = vmatpush2.msra.mxu0 0.0
  %188 = vmatprep.subr.mxu0 0.0
  %189 = vmatpush2.msra.mxu0 0.0
  %190 = vmatprep.subr.mxu0 0.0
  %191 = vmatpush2.msra.mxu0 0.0
  %192 = vmatprep.subr.mxu0 0.0
  %193 = vmatpush2.msra.mxu0 0.0
  %194 = vmatprep.subr.mxu0 0.0
  %195 = vmatpush2.msra.mxu0 0.0
  %196 = vmatprep.subr.mxu0 0.0
  %197 = vmatpush2.msra.mxu0 0.0
  %198 = vmatprep.subr.mxu0 0.0
  %199 = vmatpush2.msra.mxu0 0.0
  %200 = vmatprep.subr.mxu0 0.0
  %201 = vmatpush2.msra.mxu0 0.0
  %202 = vmatprep.subr.mxu0 0.0
  %203 = vmatpush2.msra.mxu0 0.0
  %204 = vmatprep.mubr.f32.mxu0 0.0
  %205 = vmatmul.mubr.f32.gmra.mxu0 %v134
  %v206 = vpop.f32.mrf.mxu0
  %v207 = vadd.f32 %v131, %v206
  %v208 = vpop.f32.mrf.mxu0
  %209 = vdwg.mxu0
  %210 = vst [vmem:[%s3] sm:$0x7] %v207
  // Predicated region
  $region14: #{my_net_with_detach.1} parent=0 // pred_check
    _
  $region15: #{my_net_with_detach.1} parent=0 // pred_check_branch
    %212 = sbr.rel (0) target = $region17
  $region16: #{my_net_with_detach.1} parent=0 // pred_region
    _
  $region17: #{my_net_with_detach.1} parent=0 // pred_fallthru
    _
  // Predicated region
  $region18: #{my_net_with_detach.1} parent=0 // pred_check
    _
  $region19: #{my_net_with_detach.1} parent=0 // pred_check_branch
    %214 = sbr.rel (0) target = $region21
  $region20: #{my_net_with_detach.1} parent=0 // pred_region
    _
  $region21: #{my_net_with_detach.1} parent=0 // pred_fallthru
    _

</llo_original>
